<compile_context>
chip_gen: v7x
topology: tpu7x:2x2x1
jax: 0.10.0
libtpu: 0.0.40
codegen_flags: <defaults>
</compile_context>

<pallas_src>
import functools

import numpy as np
import jax
import jax.numpy as jnp
from jax.experimental import pallas as pl
from jax.experimental.pallas import tpu as pltpu


def _gat_kernel(x_ref, wt_ref, a_ref, adj_ref, out_ref,
                h_ref, fsrc_ref, fdst_ref, acc_ref,
                *, alpha: float, concat: bool, t_src: int):
    i = pl.program_id(0)

    # ---- one-time prologue: h = x @ W^T and the attention projections ----------
    @pl.when(i == 0)
    def _init():
        h = jax.lax.dot_general(
            x_ref[...], wt_ref[...], (((1,), (0,)), ((), ())),
            preferred_element_type=jnp.float32)                           # (N, D)
        h_ref[...] = h
        a = a_ref[...]                                                    # (2, D)
        # f_src[n] = h[n].a_src, f_dst[n] = h[n].a_dst -- computed once over the
        # full h and reused by every src tile (no per-step recompute over all of h).
        fsrc_ref[...] = jax.lax.dot_general(
            h, a[0:1, :], (((1,), (1,)), ((), ())),
            preferred_element_type=jnp.float32)                           # (N, 1)
        fdst_ref[...] = jax.lax.dot_general(
            a[1:2, :], h, (((1,), (1,)), ((), ())),
            preferred_element_type=jnp.float32)                           # (1, N)
        acc_ref[...] = jnp.zeros_like(acc_ref)

    # ---- per source-tile masked softmax -----------------------------------------
    r = pl.multiple_of(i * t_src, t_src)
    h_tile = h_ref[pl.ds(r, t_src), :]                                    # (T, D)
    f_src = fsrc_ref[pl.ds(r, t_src), :]                                  # (T, 1)
    f_dst = fdst_ref[...]                                                 # (1, N)

    mask = adj_ref[...] != 0                                              # (T, N)
    e = f_src + f_dst                                                     # (T, N)
    e = jnp.maximum(e, jnp.float32(alpha) * e)                            # LeakyReLU (alpha<1)

    neg = jnp.float32(-1e30)
    row_max = jnp.max(jnp.where(mask, e, neg), axis=1, keepdims=True)     # (T, 1)
    p = jnp.where(mask, jnp.exp(e - row_max), jnp.float32(0.0))           # (T, N)
    denom = jnp.sum(p, axis=1, keepdims=True)                             # (T, 1)
    # approx reciprocal runs on the EUP slot; the clamp keeps isolated nodes
    # (denom == 0 -> attn row == 0, matching the reference) away from 1/0.
    inv = pl.reciprocal(jnp.maximum(denom, jnp.float32(1e-30)), approx=True)
    attn = p * inv                                                        # (T, N)
    # TODO(synk): F.dropout on the attention weights is omitted (eval mode).

    # ---- aggregate: acc[dst] += sum_src attn[src, dst] * h[src] == attn^T @ h ----
    # bf16 operands, f32 accumulation: single-pass MXU on v5e/v6e/v7x.
    acc_ref[...] += jax.lax.dot_general(
        attn.astype(jnp.bfloat16), h_tile.astype(jnp.bfloat16),
        (((0,), (0,)), ((), ())),
        preferred_element_type=jnp.float32)                               # (N, D)

    # ---- epilogue: activation + single store of the resident output -------------
    @pl.when(i == pl.num_programs(0) - 1)
    def _finalize():
        hp = acc_ref[...]
        if concat:
            # ELU(alpha=1); min() keeps exp() finite on the discarded branch.
            out_ref[...] = jnp.where(hp > 0, hp,
                                     jnp.exp(jnp.minimum(hp, 0.0)) - 1.0)
        else:
            out_ref[...] = hp


def _pick_t_src(n_nodes, in_dim, out_dim, vmem_budget=40 * 1024 * 1024):
    """Largest src-tile (multiple of 32 for the int8 adj panel) that fits VMEM."""
    fixed = (3 * n_nodes * out_dim + n_nodes * in_dim + 2 * n_nodes
             + in_dim * out_dim) * 4                      # h, acc, out, x, f vecs, W
    for t in (1024, 512, 256, 128, 64, 32):
        if t <= n_nodes and n_nodes % t == 0:
            per_tile = 2 * t * n_nodes                    # double-buffered int8 adj
            per_tile += 5 * t * n_nodes * 4               # e/p/mask/attn f32 temps
            if fixed + per_tile <= vmem_budget:
                return t
    return n_nodes                                        # full-dim block is always legal


def graph_attention_layer(x, edge_index, W, a, *, alpha=0.2, concat=True, t_src=None):
    """JAX/Pallas equivalent of GraphAttentionLayer.forward (eval mode)."""
    N, in_dim = x.shape
    out_dim = W.shape[0]

    # Glue: parameter re-layout + densify edge_index into an int8 adjacency.
    # TODO(synk): for genuinely sparse graphs, pass CSR offsets via scalar prefetch
    # (PrefetchScalarGridSpec) instead of materializing the O(N^2) dense adjacency.
    wt = W.T.astype(jnp.float32)                                        # (in_dim, out_dim)
    a2 = jnp.stack([a[0, :out_dim], a[0, out_dim:]], axis=0).astype(jnp.float32)
    src, dst = edge_index[0], edge_index[1]
    adj = jnp.zeros((N, N), jnp.int8).at[src, dst].set(1)               # adj[src, dst] = 1

    if t_src is None:
        t_src = _pick_t_src(N, in_dim, out_dim)
    if N % int(t_src) != 0:
        t_src = N
    t_src = int(t_src)
    n_steps = N // t_src

    kernel = functools.partial(_gat_kernel, alpha=float(alpha),
                               concat=bool(concat), t_src=t_src)

    # Raise the scoped-VMEM ceiling (16/32 MiB default) but stay well under the
    # 64 MiB physical VMEM of v7x.
    est_bytes = ((4 * N * out_dim + N * in_dim + in_dim * out_dim) * 4
                 + 2 * t_src * N + 6 * t_src * N * 4)
    vmem_limit = int(min(48 * 1024 * 1024, max(16 * 1024 * 1024, 2 * est_bytes)))

    cost = pl.CostEstimate(
        flops=int(2 * N * in_dim * out_dim + 2 * N * N * out_dim + 6 * N * out_dim),
        transcendentals=int(N * N),
        bytes_accessed=int(N * N + (N * in_dim + 2 * N * out_dim + in_dim * out_dim) * 4))

    grid_spec = pltpu.PrefetchScalarGridSpec(
        num_scalar_prefetch=0,
        grid=(n_steps,),
        in_specs=[
            pl.BlockSpec((N, in_dim), lambda i: (0, 0)),        # x (resident)
            pl.BlockSpec((in_dim, out_dim), lambda i: (0, 0)),  # W^T (resident)
            pl.BlockSpec((2, out_dim), lambda i: (0, 0)),       # a halves (resident)
            pl.BlockSpec((t_src, N), lambda i: (i, 0)),         # int8 adj panel (pipelined)
        ],
        out_specs=pl.BlockSpec((N, out_dim), lambda i: (0, 0)), # resident output
        scratch_shapes=[
            pltpu.VMEM((N, out_dim), jnp.float32),              # h
            pltpu.VMEM((N, 1), jnp.float32),                    # f_src per node
            pltpu.VMEM((1, N), jnp.float32),                    # f_dst per node
            pltpu.VMEM((N, out_dim), jnp.float32),              # accumulator
        ])

    return pl.pallas_call(
        kernel,
        out_shape=jax.ShapeDtypeStruct((N, out_dim), jnp.float32),
        grid_spec=grid_spec,
        compiler_params=pltpu.CompilerParams(
            dimension_semantics=("arbitrary",),                 # src axis reduces into acc
            vmem_limit_bytes=vmem_limit),
        cost_estimate=cost,
    )(x.astype(jnp.float32), wt, a2, adj)


def _reference_numpy(x, W, a, edge_index, alpha=0.2):
    """Direct numpy transcription of the PyTorch forward (training=False)."""
    h = x @ W.T
    src, dst = edge_index[0], edge_index[1]
    a_in = np.concatenate([h[src], h[dst]], axis=1)
    e = a_in @ a[0]
    e = np.where(e > 0, e, alpha * e)
    attention = np.zeros_like(e)
    N = h.shape[0]
    for i in range(N):
        idx = np.nonzero(src == i)[0]
        if len(idx) > 0:
            m = e[idx].max()
            ex = np.exp(e[idx] - m)
            attention[idx] = ex / ex.sum()
    h_prime = np.zeros_like(h)
    for i in range(N):
        idx = np.nonzero(dst == i)[0]
        if len(idx) > 0:
            h_prime[i] = np.sum(attention[idx][:, None] * h[src[idx]], axis=0)
    return np.where(h_prime > 0, h_prime, np.exp(h_prime) - 1.0)


if __name__ == "__main__":
    key = jax.random.PRNGKey(0)
    k1, k2, k3 = jax.random.split(key, 3)

    num_nodes, in_dim, out_dim = 128, 64, 128
    x = jax.random.normal(k1, (num_nodes, in_dim), jnp.float32)
    # nn.Linear(in_dim, out_dim, bias=False).weight  -> (out_dim, in_dim)
    W = 0.1 * jax.random.normal(k2, (out_dim, in_dim), jnp.float32)
    # nn.Linear(2*out_dim, 1, bias=False).weight     -> (1, 2*out_dim)
    a = 0.1 * jax.random.normal(k3, (1, 2 * out_dim), jnp.float32)

    # Deterministic graph: self loops + ring + skip-3 edges (unique (src, dst) pairs).
    src_list, dst_list = [], []
    for i in range(num_nodes):
        for off in (0, 1, 3):
            src_list.append(i)
            dst_list.append((i + off) % num_nodes)
    edge_index = jnp.array([src_list, dst_list], dtype=jnp.int32)   # (2, 384)

    # t_src=32 -> grid of 4 src tiles, exercising the pipelined/accumulating path.
    out = graph_attention_layer(x, edge_index, W, a, alpha=0.2, concat=True, t_src=32)
    out = jax.block_until_ready(out)

    ref = _reference_numpy(np.asarray(x), np.asarray(W), np.asarray(a),
                           np.asarray(edge_index), alpha=0.2)
    # Tolerance reflects intentional bf16-operand / f32-accumulate MXU path.
    np.testing.assert_allclose(np.asarray(out), ref, rtol=3e-2, atol=3e-2)
    print("KERNEL_OK")
</pallas_src>

<mosaic_0001>
module attributes {stable_mosaic.version = 11 : i64} {
  func.func @_gat_kernel(%arg0: i32, %arg1: memref<128x64xf32, #tpu.memory_space<vmem>>, %arg2: memref<64x128xf32, #tpu.memory_space<vmem>>, %arg3: memref<2x128xf32, #tpu.memory_space<vmem>>, %arg4: memref<32x128xi8, #tpu.memory_space<vmem>>, %arg5: memref<128x128xf32, #tpu.memory_space<vmem>>, %arg6: memref<128x128xf32, #tpu.memory_space<vmem>>, %arg7: memref<128x1xf32, #tpu.memory_space<vmem>>, %arg8: memref<1x128xf32, #tpu.memory_space<vmem>>, %arg9: memref<128x128xf32, #tpu.memory_space<vmem>>) attributes {dimension_semantics = [#tpu.dimension_semantics<arbitrary>], iteration_bounds = array<i64: 4>, scalar_prefetch = 0 : i64, scratch_operands = 4 : i64, tpu.core_type = #tpu.core_type<tc>, window_params = [{pipeline_mode = #tpu.pipeline_mode<synchronous>, transform_indices = @transform_0, window_bounds = array<i64: 128, 64>}, {pipeline_mode = #tpu.pipeline_mode<synchronous>, transform_indices = @transform_1, window_bounds = array<i64: 64, 128>}, {pipeline_mode = #tpu.pipeline_mode<synchronous>, transform_indices = @transform_2, window_bounds = array<i64: 2, 128>}, {transform_indices = @transform_3, window_bounds = array<i64: 32, 128>}, {pipeline_mode = #tpu.pipeline_mode<synchronous>, transform_indices = @transform_4, window_bounds = array<i64: 128, 128>}]} {
    %c0_i32 = arith.constant 0 : i32
    %0 = arith.cmpi eq, %arg0, %c0_i32 : i32
    %1 = arith.extui %0 : i1 to i32
    %c0_i32_0 = arith.constant 0 : i32
    %2 = arith.cmpi ne, %1, %c0_i32_0 : i32
    scf.if %2 {
      %c0_17 = arith.constant 0 : index
      %c0_18 = arith.constant 0 : index
      %44 = vector.load %arg1[%c0_17, %c0_18] : memref<128x64xf32, #tpu.memory_space<vmem>>, vector<128x64xf32>
      %c0_19 = arith.constant 0 : index
      %c0_20 = arith.constant 0 : index
      %45 = vector.load %arg2[%c0_19, %c0_20] : memref<64x128xf32, #tpu.memory_space<vmem>>, vector<64x128xf32>
      %cst_21 = arith.constant dense<0.000000e+00> : vector<128x128xf32>
      %46 = tpu.matmul %44, %45, %cst_21 {dimension_numbers = #tpu.dot_dimension_numbers<[1], [0], [0], [1], [0, 0, 1, 1], [], []>} : vector<128x64xf32>, vector<64x128xf32>, vector<128x128xf32> -> vector<128x128xf32>
      %c0_22 = arith.constant 0 : index
      %c0_23 = arith.constant 0 : index
      %47 = vector.load %arg6[%c0_22, %c0_23] : memref<128x128xf32, #tpu.memory_space<vmem>>, vector<128x128xf32>
      tpu.vector_store %arg6[%c0_22, %c0_23], %46 {strides = array<i32>} : memref<128x128xf32, #tpu.memory_space<vmem>>, vector<128x128xf32>,
      %c0_24 = arith.constant 0 : index
      %c0_25 = arith.constant 0 : index
      %48 = vector.load %arg3[%c0_24, %c0_25] : memref<2x128xf32, #tpu.memory_space<vmem>>, vector<2x128xf32>
      %49 = vector.extract_strided_slice %48 {offsets = [0, 0], sizes = [1, 128], strides = [1, 1]} : vector<2x128xf32> to vector<1x128xf32>
      %cst_26 = arith.constant dense<0.000000e+00> : vector<128x1xf32>
      %50 = tpu.matmul %46, %49, %cst_26 {dimension_numbers = #tpu.dot_dimension_numbers<[1], [1], [0], [0], [0, 0, 1, 0], [], []>} : vector<128x128xf32>, vector<1x128xf32>, vector<128x1xf32> -> vector<128x1xf32>
      %c0_27 = arith.constant 0 : index
      %c0_28 = arith.constant 0 : index
      %51 = vector.load %arg7[%c0_27, %c0_28] : memref<128x1xf32, #tpu.memory_space<vmem>>, vector<128x1xf32>
      tpu.vector_store %arg7[%c0_27, %c0_28], %50 {strides = array<i32>} : memref<128x1xf32, #tpu.memory_space<vmem>>, vector<128x1xf32>,
      %52 = vector.extract_strided_slice %48 {offsets = [1, 0], sizes = [1, 128], strides = [1, 1]} : vector<2x128xf32> to vector<1x128xf32>
      %cst_29 = arith.constant dense<0.000000e+00> : vector<1x128xf32>
      %53 = tpu.matmul %52, %46, %cst_29 {dimension_numbers = #tpu.dot_dimension_numbers<[1], [1], [0], [0], [0, 0, 1, 0], [], []>} : vector<1x128xf32>, vector<128x128xf32>, vector<1x128xf32> -> vector<1x128xf32>
      %c0_30 = arith.constant 0 : index
      %c0_31 = arith.constant 0 : index
      %54 = vector.load %arg8[%c0_30, %c0_31] : memref<1x128xf32, #tpu.memory_space<vmem>>, vector<1x128xf32>
      tpu.vector_store %arg8[%c0_30, %c0_31], %53 {strides = array<i32>} : memref<1x128xf32, #tpu.memory_space<vmem>>, vector<1x128xf32>,
      %cst_32 = arith.constant 0.000000e+00 : f32
      %55 = vector.broadcast %cst_32 : f32 to vector<128x128xf32>
      %c0_33 = arith.constant 0 : index
      %c0_34 = arith.constant 0 : index
      %56 = vector.load %arg9[%c0_33, %c0_34] : memref<128x128xf32, #tpu.memory_space<vmem>>, vector<128x128xf32>
      tpu.vector_store %arg9[%c0_33, %c0_34], %55 {strides = array<i32>} : memref<128x128xf32, #tpu.memory_space<vmem>>, vector<128x128xf32>,
    } else {
    }
    %c32_i32 = arith.constant 32 : i32
    %3 = arith.muli %arg0, %c32_i32 : i32
    %4 = tpu.assume_multiple %3, 32 : i32
    %5 = arith.index_cast %4 : i32 to index
    %c0 = arith.constant 0 : index
    %6 = vector.load %arg6[%5, %c0] : memref<128x128xf32, #tpu.memory_space<vmem>>, vector<32x128xf32>
    %7 = arith.index_cast %4 : i32 to index
    %c0_1 = arith.constant 0 : index
    %8 = vector.load %arg7[%7, %c0_1] : memref<128x1xf32, #tpu.memory_space<vmem>>, vector<32x1xf32>
    %c0_2 = arith.constant 0 : index
    %c0_3 = arith.constant 0 : index
    %9 = vector.load %arg8[%c0_2, %c0_3] : memref<1x128xf32, #tpu.memory_space<vmem>>, vector<1x128xf32>
    %c0_4 = arith.constant 0 : index
    %c0_5 = arith.constant 0 : index
    %10 = vector.load %arg4[%c0_4, %c0_5] : memref<32x128xi8, #tpu.memory_space<vmem>>, vector<32x128xi8>
    %c0_i8 = arith.constant 0 : i8
    %11 = vector.broadcast %c0_i8 : i8 to vector<32x128xi8>
    %12 = arith.cmpi ne, %10, %11 : vector<32x128xi8>
    %13 = vector.broadcast %8 : vector<32x1xf32> to vector<32x128xf32>
    %14 = vector.broadcast %9 : vector<1x128xf32> to vector<32x128xf32>
    %15 = arith.addf %13, %14 : vector<32x128xf32>
    %cst = arith.constant 2.000000e-01 : f32
    %16 = vector.broadcast %cst : f32 to vector<32x128xf32>
    %17 = arith.mulf %16, %15 : vector<32x128xf32>
    %18 = arith.maximumf %15, %17 : vector<32x128xf32>
    %cst_6 = arith.constant -1.000000e+30 : f32
    %19 = vector.broadcast %cst_6 : f32 to vector<32x128xf32>
    %20 = arith.select %12, %18, %19 : vector<32x128xi1>, vector<32x128xf32>
    %cst_7 = arith.constant dense<0xFF800000> : vector<32xf32>
    %21 = vector.multi_reduction <maximumf>, %20, %cst_7 [1] : vector<32x128xf32> to vector<32xf32>
    %22 = vector.shape_cast %21 : vector<32xf32> to vector<32x1xf32>
    %23 = vector.broadcast %22 : vector<32x1xf32> to vector<32x128xf32>
    %24 = arith.subf %18, %23 : vector<32x128xf32>
    %25 = math.exp %24 : vector<32x128xf32>
    %cst_8 = arith.constant 0.000000e+00 : f32
    %26 = vector.broadcast %cst_8 : f32 to vector<32x128xf32>
    %27 = arith.select %12, %25, %26 : vector<32x128xi1>, vector<32x128xf32>
    %cst_9 = arith.constant dense<0.000000e+00> : vector<32xf32>
    %28 = vector.multi_reduction <add>, %27, %cst_9 [1] : vector<32x128xf32> to vector<32xf32>
    %29 = vector.shape_cast %28 : vector<32xf32> to vector<32x1xf32>
    %cst_10 = arith.constant 1.000000e-30 : f32
    %30 = vector.broadcast %cst_10 : f32 to vector<32x1xf32>
    %31 = arith.maximumf %29, %30 : vector<32x1xf32>
    %32 = tpu.reciprocal %31 {approx = true} : vector<32x1xf32> -> vector<32x1xf32>
    %33 = vector.broadcast %32 : vector<32x1xf32> to vector<32x128xf32>
    %34 = arith.mulf %27, %33 : vector<32x128xf32>
    %c0_11 = arith.constant 0 : index
    %c0_12 = arith.constant 0 : index
    %35 = vector.load %arg9[%c0_11, %c0_12] : memref<128x128xf32, #tpu.memory_space<vmem>>, vector<128x128xf32>
    %36 = arith.truncf %34 : vector<32x128xf32> to vector<32x128xbf16>
    %37 = arith.truncf %6 : vector<32x128xf32> to vector<32x128xbf16>
    %cst_13 = arith.constant dense<0.000000e+00> : vector<128x128xf32>
    %38 = tpu.matmul %36, %37, %cst_13 {dimension_numbers = #tpu.dot_dimension_numbers<[0], [0], [1], [1], [0, 1, 1, 1], [], []>} : vector<32x128xbf16>, vector<32x128xbf16>, vector<128x128xf32> -> vector<128x128xf32>
    %39 = arith.addf %35, %38 : vector<128x128xf32>
    %c0_14 = arith.constant 0 : index
    %c0_15 = arith.constant 0 : index
    %40 = vector.load %arg9[%c0_14, %c0_15] : memref<128x128xf32, #tpu.memory_space<vmem>>, vector<128x128xf32>
    tpu.vector_store %arg9[%c0_14, %c0_15], %39 {strides = array<i32>} : memref<128x128xf32, #tpu.memory_space<vmem>>, vector<128x128xf32>,
    %c3_i32 = arith.constant 3 : i32
    %41 = arith.cmpi eq, %arg0, %c3_i32 : i32
    %42 = arith.extui %41 : i1 to i32
    %c0_i32_16 = arith.constant 0 : i32
    %43 = arith.cmpi ne, %42, %c0_i32_16 : i32
    scf.if %43 {
      %c0_17 = arith.constant 0 : index
      %c0_18 = arith.constant 0 : index
      %44 = vector.load %arg9[%c0_17, %c0_18] : memref<128x128xf32, #tpu.memory_space<vmem>>, vector<128x128xf32>
      %cst_19 = arith.constant 0.000000e+00 : f32
      %45 = vector.broadcast %cst_19 : f32 to vector<128x128xf32>
      %46 = arith.cmpf ogt, %44, %45 : vector<128x128xf32>
      %cst_20 = arith.constant 0.000000e+00 : f32
      %47 = vector.broadcast %cst_20 : f32 to vector<128x128xf32>
      %48 = arith.minimumf %44, %47 : vector<128x128xf32>
      %49 = math.exp %48 : vector<128x128xf32>
      %cst_21 = arith.constant 1.000000e+00 : f32
      %50 = vector.broadcast %cst_21 : f32 to vector<128x128xf32>
      %51 = arith.subf %49, %50 : vector<128x128xf32>
      %52 = arith.select %46, %44, %51 : vector<128x128xi1>, vector<128x128xf32>
      %c0_22 = arith.constant 0 : index
      %c0_23 = arith.constant 0 : index
      %53 = vector.load %arg5[%c0_22, %c0_23] : memref<128x128xf32, #tpu.memory_space<vmem>>, vector<128x128xf32>
      tpu.vector_store %arg5[%c0_22, %c0_23], %52 {strides = array<i32>} : memref<128x128xf32, #tpu.memory_space<vmem>>, vector<128x128xf32>,
    } else {
    }
    return
  }
  func.func @transform_0(%arg0: i32) -> (i32, i32) {
    %c0_i32 = arith.constant 0 : i32
    %c0_i32_0 = arith.constant 0 : i32
    %c0_i32_1 = arith.constant 0 : i32
    return %c0_i32, %c0_i32_0 : i32, i32
  }
  func.func @transform_1(%arg0: i32) -> (i32, i32) {
    %c0_i32 = arith.constant 0 : i32
    %c0_i32_0 = arith.constant 0 : i32
    %c0_i32_1 = arith.constant 0 : i32
    return %c0_i32, %c0_i32_0 : i32, i32
  }
  func.func @transform_2(%arg0: i32) -> (i32, i32) {
    %c0_i32 = arith.constant 0 : i32
    %c0_i32_0 = arith.constant 0 : i32
    %c0_i32_1 = arith.constant 0 : i32
    return %c0_i32, %c0_i32_0 : i32, i32
  }
  func.func @transform_3(%arg0: i32) -> (i32, i32) {
    %c0_i32 = arith.constant 0 : i32
    %c0_i32_0 = arith.constant 0 : i32
    return %arg0, %c0_i32 : i32, i32
  }
  func.func @transform_4(%arg0: i32) -> (i32, i32) {
    %c0_i32 = arith.constant 0 : i32
    %c0_i32_0 = arith.constant 0 : i32
    %c0_i32_1 = arith.constant 0 : i32
    return %c0_i32, %c0_i32_0 : i32, i32
  }
}

</mosaic_0001>

<llo_original>
// kernel: tpu_custom_call.1
$region0: #{tpu_custom_call.1}
  #allocation0 [shape = 'u32[]', space=smem, size = 0x4, offset = 0x4, fixed_abs, tag = 'smem constant byte address 0x4 - core index']
  #allocation1 [shape = 'u32[144,128]{1,0:T(1,128)}', space=vmem, size = 0x12000, scoped, tag = 'internal scratch']
  #allocation2 [shape = 'f32[128,128]{1,0:T(8,128)}', space=vmem, size = 0x10000, scoped, tag = 'scratch operand']
  #allocation3 [shape = 'f32[128,1]{1,0:T(8,128)}', space=vmem, size = 0x10000, scoped, tag = 'scratch operand']
  #allocation4 [shape = 'f32[1,128]{1,0:T(1,128)}', space=vmem, size = 0x200, scoped, tag = 'scratch operand']
  #allocation5 [shape = 'f32[128,128]{1,0:T(8,128)}', space=vmem, size = 0x10000, scoped, tag = 'scratch operand']
  %s0 = inlined_call_operand.vmem [shape: f32[128,64], index: 0, kind: input, shape index: {}]
  %s1 = inlined_call_operand.vmem [shape: f32[64,128], index: 1, kind: input, shape index: {}]
  %s2 = inlined_call_operand.vmem [shape: f32[2,128], index: 2, kind: input, shape index: {}]
  %s3 = inlined_call_operand.vmem [shape: s8[128,128], index: 3, kind: input, shape index: {}]
  %s4 = inlined_call_operand.hbm [shape: f32[128,128], index: 4, kind: output, shape index: {}]
  %s5 = sld [smem:[#allocation0]]
  $region57: #{tpu_custom_call.1} parent=0
    _
  %s7 = ssub.s32 1, %s5
  %s8 = scalar_select 0, %s7, %s5
  $region1: #{tpu_custom_call.1} parent=0
    #allocation6 [shape = 'u8[65536]{0}', space=vmem, size = 0x10000, scoped, tag = 'output window, operand 0, single buffered']
    #allocation7 [shape = 's32[2]{0}', space=sflag, size = 0x8, scoped, tag = 'scoped memory for tpu_custom_call.1']
    %9 = vsyncpa [#allocation7], 0
    loop: start=0, step=1, limit=6
    $region2: #{tpu_custom_call.1} parent=1 // loop_pre_header
      _
    $region3: #{tpu_custom_call.1} parent=1 // loop_header
      %s11 = sphi 0, %s15
      %p12 = scmp.ge.s32.totalorder %s11, 6
      %s19 = sphi 0, %s19
      %s21 = sphi 0, %s19
      %s22 = sphi 0, %s21
      %s36 = sphi 0, %s22
      %s40 = sphi 0, %s40
      %s42 = sphi 0, %s40
      %s43 = sphi 0, %s42
      %s57 = sphi 0, %s43
      %s61 = sphi 0, %s61
      %s63 = sphi 0, %s61
      %s64 = sphi 0, %s63
      %s78 = sphi 0, %s64
      %s84 = sphi 0, %s86
      %s87 = sphi 0, %s84
      %s88 = sphi 0, %s87
      %s104 = sphi 0, %s88
      %s108 = sphi 0, %s108
      %s110 = sphi 0, %s108
      %s111 = sphi 0, %s110
      %s125 = sphi 0, %s111
    $region4: #{tpu_custom_call.1} parent=1 // loop_header_branch
      %14 = sbr.rel (%p12) target = $region8
    $region5: #{tpu_custom_call.1} parent=1 // loop_body
      %s16 = ssub.s32 %s11, 1
      %s17 = ssub.s32 %s11, 2
      %s18 = sadd.s32 %s11, 1
      %s20 = sadd.s32 %s19, 1
      %p23 = scmp.eq.s32.totalorder %s11, 3
      %p24 = scmp.ne.s32.totalorder %s19, %s21
      %p25 = scmp.eq.s32.totalorder %s11, 0
      %p26 = por %p24, %p25
      %p27 = scmp.ne.s32.totalorder %s19, %s21
      %p28 = scmp.eq.s32.totalorder %s16, 3
      %p29 = por %p27, %p28
      %p30 = scmp.ne.s32.totalorder %s21, %s22
      %p31 = scmp.eq.s32.totalorder %s16, 0
      %p32 = por %p30, %p31
      %p33 = scmp.ne.s32.totalorder %s21, %s22
      %p34 = scmp.eq.s32.totalorder %s17, 3
      %p35 = por %p33, %p34
      %p37 = scmp.ne.s32.totalorder %s22, %s36
      %p38 = scmp.eq.s32.totalorder %s17, 0
      %p39 = por %p37, %p38
      %s41 = sadd.s32 %s40, 1
      %p44 = scmp.eq.s32.totalorder %s11, 3
      %p45 = scmp.ne.s32.totalorder %s40, %s42
      %p46 = scmp.eq.s32.totalorder %s11, 0
      %p47 = por %p45, %p46
      %p48 = scmp.ne.s32.totalorder %s40, %s42
      %p49 = scmp.eq.s32.totalorder %s16, 3
      %p50 = por %p48, %p49
      %p51 = scmp.ne.s32.totalorder %s42, %s43
      %p52 = scmp.eq.s32.totalorder %s16, 0
      %p53 = por %p51, %p52
      %p54 = scmp.ne.s32.totalorder %s42, %s43
      %p55 = scmp.eq.s32.totalorder %s17, 3
      %p56 = por %p54, %p55
      %p58 = scmp.ne.s32.totalorder %s43, %s57
      %p59 = scmp.eq.s32.totalorder %s17, 0
      %p60 = por %p58, %p59
      %s62 = sadd.s32 %s61, 1
      %p65 = scmp.eq.s32.totalorder %s11, 3
      %p66 = scmp.ne.s32.totalorder %s61, %s63
      %p67 = scmp.eq.s32.totalorder %s11, 0
      %p68 = por %p66, %p67
      %p69 = scmp.ne.s32.totalorder %s61, %s63
      %p70 = scmp.eq.s32.totalorder %s16, 3
      %p71 = por %p69, %p70
      %p72 = scmp.ne.s32.totalorder %s63, %s64
      %p73 = scmp.eq.s32.totalorder %s16, 0
      %p74 = por %p72, %p73
      %p75 = scmp.ne.s32.totalorder %s63, %s64
      %p76 = scmp.eq.s32.totalorder %s17, 3
      %p77 = por %p75, %p76
      %p79 = scmp.ne.s32.totalorder %s64, %s78
      %p80 = scmp.eq.s32.totalorder %s17, 0
      %p81 = por %p79, %p80
      %s82 = ssub.s32 %s11, %s18
      %p83 = scmp.eq.s32.totalorder %s82, 0
      %s85 = sadd.s32 %s84, 1
      %s86 = scalar_select %p83, %s84, %s85
      %p89 = pneg %p83
      %p90 = scmp.eq.s32.totalorder %s11, 3
      %p91 = por %p89, %p90
      %p92 = scmp.ne.s32.totalorder %s84, %s87
      %p93 = scmp.eq.s32.totalorder %s11, 0
      %p94 = por %p92, %p93
      %p95 = scmp.ne.s32.totalorder %s84, %s87
      %p96 = scmp.eq.s32.totalorder %s16, 3
      %p97 = por %p95, %p96
      %p98 = scmp.ne.s32.totalorder %s87, %s88
      %p99 = scmp.eq.s32.totalorder %s16, 0
      %p100 = por %p98, %p99
      %p101 = scmp.ne.s32.totalorder %s87, %s88
      %p102 = scmp.eq.s32.totalorder %s17, 3
      %p103 = por %p101, %p102
      %p105 = scmp.ne.s32.totalorder %s88, %s104
      %p106 = scmp.eq.s32.totalorder %s17, 0
      %p107 = por %p105, %p106
      %s109 = sadd.s32 %s108, 1
      %p112 = scmp.eq.s32.totalorder %s11, 3
      %p113 = scmp.ne.s32.totalorder %s108, %s110
      %p114 = scmp.eq.s32.totalorder %s11, 0
      %p115 = por %p113, %p114
      %p116 = scmp.ne.s32.totalorder %s108, %s110
      %p117 = scmp.eq.s32.totalorder %s16, 3
      %p118 = por %p116, %p117
      %p119 = scmp.ne.s32.totalorder %s110, %s111
      %p120 = scmp.eq.s32.totalorder %s16, 0
      %p121 = por %p119, %p120
      %p122 = scmp.ne.s32.totalorder %s110, %s111
      %p123 = scmp.eq.s32.totalorder %s17, 3
      %p124 = por %p122, %p123
      %p126 = scmp.ne.s32.totalorder %s111, %s125
      %p127 = scmp.eq.s32.totalorder %s17, 0
      %p128 = por %p126, %p127
      %p129 = scmp.le.s32.totalorder 1, %s11
      %p130 = scmp.lt.s32.totalorder %s11, 5
      %p131 = pnand %p129, %p130
      %p132 = pneg %p131
      // Predicated region
      $region9: #{tpu_custom_call.1} parent=5 // pred_check
        _
      $region10: #{tpu_custom_call.1} parent=5 // pred_check_branch
        %134 = sbr.rel (%p131) target = $region12
      $region11: #{tpu_custom_call.1} parent=5 // pred_region
        %s135 = ssub.s32 %s11, 1
        // Predicated region
        $region13: #{tpu_custom_call.1} parent=11 // pred_check
          %p136 = pneg %p32
        $region14: #{tpu_custom_call.1} parent=11 // pred_check_branch
          %138 = sbr.rel (%p136) target = $region16
        $region15: #{tpu_custom_call.1} parent=11 // pred_region
          _
        $region16: #{tpu_custom_call.1} parent=11 // pred_fallthru
          _
        // Predicated region
        $region17: #{tpu_custom_call.1} parent=11 // pred_check
          %p139 = pneg %p53
        $region18: #{tpu_custom_call.1} parent=11 // pred_check_branch
          %141 = sbr.rel (%p139) target = $region20
        $region19: #{tpu_custom_call.1} parent=11 // pred_region
          _
        $region20: #{tpu_custom_call.1} parent=11 // pred_fallthru
          _
        // Predicated region
        $region21: #{tpu_custom_call.1} parent=11 // pred_check
          %p142 = pneg %p74
        $region22: #{tpu_custom_call.1} parent=11 // pred_check_branch
          %144 = sbr.rel (%p142) target = $region24
        $region23: #{tpu_custom_call.1} parent=11 // pred_region
          _
        $region24: #{tpu_custom_call.1} parent=11 // pred_fallthru
          _
      $region12: #{tpu_custom_call.1} parent=5 // pred_fallthru
        _
      %p145 = scmp.lt.s32.totalorder %s11, 4
      // Predicated region
      $region25: #{tpu_custom_call.1} parent=5 // pred_check
        %p146 = pneg %p145
      $region26: #{tpu_custom_call.1} parent=5 // pred_check_branch
        %148 = sbr.rel (%p146) target = $region28
      $region27: #{tpu_custom_call.1} parent=5 // pred_region
        // Predicated region
        $region29: #{tpu_custom_call.1} parent=27 // pred_check
          %p149 = pneg %p94
        $region30: #{tpu_custom_call.1} parent=27 // pred_check_branch
          %151 = sbr.rel (%p149) target = $region32
        $region31: #{tpu_custom_call.1} parent=27 // pred_region
          %p152 = scmp.lt.s32.totalorder %s11, 3
          %s153 = scalar_select %p152, %s11, 3
          %s154 = smul.addr %s153, 8
          %s155 = scalar_lea.vmem %s3, %s154
        $region32: #{tpu_custom_call.1} parent=27 // pred_fallthru
          _
      $region28: #{tpu_custom_call.1} parent=5 // pred_fallthru
        _
      %p156 = scmp.le.s32.totalorder 1, %s11
      %p157 = scmp.lt.s32.totalorder %s11, 5
      %p158 = pnand %p156, %p157
      %p159 = pneg %p158
      // Predicated region
      $region33: #{tpu_custom_call.1} parent=5 // pred_check
        _
      $region34: #{tpu_custom_call.1} parent=5 // pred_check_branch
        %161 = sbr.rel (%p158) target = $region36
      $region35: #{tpu_custom_call.1} parent=5 // pred_region
        %s162 = ssub.s32 %s11, 1
        %p163 = pneg %p32
        %p164 = pneg %p29
        %p165 = pneg %p53
        %p166 = pneg %p50
        %p167 = pneg %p74
        %p168 = pneg %p71
        %p169 = scmp.lt.s32.totalorder %s16, 3
        %s170 = scalar_select %p169, %s16, 3
        %s171 = smul.addr %s170, 8
        %s172 = scalar_lea.vmem %s3, %s171
        %p173 = pneg %p100
        %p174 = pneg %p97
        %p175 = pneg %p121
        %p176 = pneg %p118
        %p177 = scmp.lt.s32.totalorder %s16, 3
        %s178 = scalar_select %p177, %s16, 3
        %s179 = smul.addr %s178, 8
        %s180 = scalar_lea.vmem %s3, %s179
        %p184 = scmp.eq.s32.totalorder %s16, 0
        // Predicated region
        $region37: #{tpu_custom_call.1} parent=35 // pred_check
          %p185 = pneg %p184
        $region38: #{tpu_custom_call.1} parent=35 // pred_check_branch
          %187 = sbr.rel (%p185) target = $region40
        $region39: #{tpu_custom_call.1} parent=35 // pred_region
          %v188 = vld [vmem:[%s0] sm:$0xff]
          %v189 = vld [vmem:[%s0 + $0x8] sm:$0xff]
          %v190 = vld [vmem:[%s0 + $0x10] sm:$0xff]
          %v191 = vld [vmem:[%s0 + $0x18] sm:$0xff]
          %v192 = vld [vmem:[%s0 + $0x20] sm:$0xff]
          %v193 = vld [vmem:[%s0 + $0x28] sm:$0xff]
          %v194 = vld [vmem:[%s0 + $0x30] sm:$0xff]
          %v195 = vld [vmem:[%s0 + $0x38] sm:$0xff]
          %v196 = vld [vmem:[%s0 + $0x40] sm:$0xff]
          %v197 = vld [vmem:[%s0 + $0x48] sm:$0xff]
          %v198 = vld [vmem:[%s0 + $0x50] sm:$0xff]
          %v199 = vld [vmem:[%s0 + $0x58] sm:$0xff]
          %v200 = vld [vmem:[%s0 + $0x60] sm:$0xff]
          %v201 = vld [vmem:[%s0 + $0x68] sm:$0xff]
          %v202 = vld [vmem:[%s0 + $0x70] sm:$0xff]
          %v203 = vld [vmem:[%s0 + $0x78] sm:$0xff]
          %v204 = vld [vmem:[%s1] sm:$0xff]
          %v205 = vld [vmem:[%s1 + $0x8] sm:$0xff]
          %v206 = vld [vmem:[%s1 + $0x10] sm:$0xff]
          %v207 = vld [vmem:[%s1 + $0x18] sm:$0xff]
          %v208 = vld [vmem:[%s1 + $0x20] sm:$0xff]
          %v209 = vld [vmem:[%s1 + $0x28] sm:$0xff]
          %v210 = vld [vmem:[%s1 + $0x30] sm:$0xff]
          %v211 = vld [vmem:[%s1 + $0x38] sm:$0xff]
          %vm212 = vcmask 523264
          %v214 = vsel %vm212, %v188, 0
          %v217 = vsel %vm212, %v189, 0
          %v220 = vsel %vm212, %v190, 0
          %v223 = vsel %vm212, %v191, 0
          %v226 = vsel %vm212, %v192, 0
          %v229 = vsel %vm212, %v193, 0
          %v232 = vsel %vm212, %v194, 0
          %v235 = vsel %vm212, %v195, 0
          %v238 = vsel %vm212, %v196, 0
          %v241 = vsel %vm212, %v197, 0
          %v244 = vsel %vm212, %v198, 0
          %v247 = vsel %vm212, %v199, 0
          %v250 = vsel %vm212, %v200, 0
          %v253 = vsel %vm212, %v201, 0
          %v256 = vsel %vm212, %v202, 0
          %v259 = vsel %vm212, %v203, 0
          %261 = vmatprep.subr.mxu0 0.0
          %262 = vmatpush1.msra.mxu0 %v204
          %263 = vmatprep.subr.mxu0 0.0
          %264 = vmatpush1.msra.mxu0 %v205
          %265 = vmatprep.subr.mxu0 0.0
          %266 = vmatpush1.msra.mxu0 %v206
          %267 = vmatprep.subr.mxu0 0.0
          %268 = vmatpush1.msra.mxu0 %v207
          %269 = vmatprep.subr.mxu0 0.0
          %270 = vmatpush1.msra.mxu0 %v208
          %271 = vmatprep.subr.mxu0 0.0
          %272 = vmatpush1.msra.mxu0 %v209
          %273 = vmatprep.subr.mxu0 0.0
          %274 = vmatpush1.msra.mxu0 %v210
          %275 = vmatprep.subr.mxu0 0.0
          %276 = vmatpush1.msra.mxu0 %v211
          %277 = vmatprep.subr.mxu0 0.0
          %278 = vmatpush1.msra.mxu0 0.0
          %279 = vmatprep.subr.mxu0 0.0
          %280 = vmatpush1.msra.mxu0 0.0
          %281 = vmatprep.subr.mxu0 0.0
          %282 = vmatpush1.msra.mxu0 0.0
          %283 = vmatprep.subr.mxu0 0.0
          %284 = vmatpush1.msra.mxu0 0.0
          %285 = vmatprep.subr.mxu0 0.0
          %286 = vmatpush1.msra.mxu0 0.0
          %287 = vmatprep.subr.mxu0 0.0
          %288 = vmatpush1.msra.mxu0 0.0
          %289 = vmatprep.subr.mxu0 0.0
          %290 = vmatpush1.msra.mxu0 0.0
          %291 = vmatprep.subr.mxu0 0.0
          %292 = vmatpush1.msra.mxu0 0.0
          %293 = vmatprep.subr.mxu0 0.0
          %294 = vmatpush1.msra.mxu0 0.0
          %295 = vmatprep.subr.mxu0 0.0
          %296 = vmatpush1.msra.mxu0 0.0
          %297 = vmatprep.subr.mxu0 0.0
          %298 = vmatpush1.msra.mxu0 0.0
          %299 = vmatprep.subr.mxu0 0.0
          %300 = vmatpush1.msra.mxu0 0.0
          %301 = vmatprep.subr.mxu0 0.0
          %302 = vmatpush1.msra.mxu0 0.0
          %303 = vmatprep.subr.mxu0 0.0
          %304 = vmatpush1.msra.mxu0 0.0
          %305 = vmatprep.subr.mxu0 0.0
          %306 = vmatpush1.msra.mxu0 0.0
          %307 = vmatprep.subr.mxu0 0.0
          %308 = vmatpush1.msra.mxu0 0.0
          %309 = vmatprep.subr.mxu0 0.0
          %310 = vmatpush1.msra.mxu0 0.0
          %311 = vmatprep.subr.mxu0 0.0
          %312 = vmatpush1.msra.mxu0 0.0
          %313 = vmatprep.subr.mxu0 0.0
          %314 = vmatpush1.msra.mxu0 0.0
          %315 = vmatprep.subr.mxu0 0.0
          %316 = vmatpush1.msra.mxu0 0.0
          %317 = vmatprep.subr.mxu0 0.0
          %318 = vmatpush1.msra.mxu0 0.0
          %319 = vmatprep.subr.mxu0 0.0
          %320 = vmatpush1.msra.mxu0 0.0
          %321 = vmatprep.subr.mxu0 0.0
          %322 = vmatpush1.msra.mxu0 0.0
          %323 = vmatprep.subr.mxu0 0.0
          %324 = vmatpush1.msra.mxu0 0.0
          %325 = vmatprep.mubr.f32.mxu0 0.0
          %326 = vmatmul.mubr.f32.gmra.mrb[0].mxu0 %v214
          %v327 = vpop.f32.mrb[0].mxu0
          %v328 = vadd.f32 0.0, %v327
          %v329 = vpop.f32.mrb[0].mxu0
          %330 = vmatprep.mubr.f32.mxu0 0.0
          %331 = vmatmul.mubr.f32.gmra.mrb[0].mxu0 %v217
          %v332 = vpop.f32.mrb[0].mxu0
          %v333 = vadd.f32 0.0, %v332
          %v334 = vpop.f32.mrb[0].mxu0
          %335 = vmatprep.mubr.f32.mxu0 0.0
          %336 = vmatmul.mubr.f32.gmra.mrb[0].mxu0 %v220
          %v337 = vpop.f32.mrb[0].mxu0
          %v338 = vadd.f32 0.0, %v337
          %v339 = vpop.f32.mrb[0].mxu0
          %340 = vmatprep.mubr.f32.mxu0 0.0
          %341 = vmatmul.mubr.f32.gmra.mrb[0].mxu0 %v223
          %v342 = vpop.f32.mrb[0].mxu0
          %v343 = vadd.f32 0.0, %v342
          %v344 = vpop.f32.mrb[0].mxu0
          %345 = vmatprep.mubr.f32.mxu0 0.0
          %346 = vmatmul.mubr.f32.gmra.mrb[0].mxu0 %v226
          %v347 = vpop.f32.mrb[0].mxu0
          %v348 = vadd.f32 0.0, %v347
          %v349 = vpop.f32.mrb[0].mxu0
          %350 = vmatprep.mubr.f32.mxu0 0.0
          %351 = vmatmul.mubr.f32.gmra.mrb[0].mxu0 %v229
          %v352 = vpop.f32.mrb[0].mxu0
          %v353 = vadd.f32 0.0, %v352
          %v354 = vpop.f32.mrb[0].mxu0
          %355 = vmatprep.mubr.f32.mxu0 0.0
          %356 = vmatmul.mubr.f32.gmra.mrb[0].mxu0 %v232
          %v357 = vpop.f32.mrb[0].mxu0
          %v358 = vadd.f32 0.0, %v357
          %v359 = vpop.f32.mrb[0].mxu0
          %360 = vmatprep.mubr.f32.mxu0 0.0
          %361 = vmatmul.mubr.f32.gmra.mrb[0].mxu0 %v235
          %v362 = vpop.f32.mrb[0].mxu0
          %v363 = vadd.f32 0.0, %v362
          %v364 = vpop.f32.mrb[0].mxu0
          %365 = vmatprep.mubr.f32.mxu0 0.0
          %366 = vmatmul.mubr.f32.gmra.mrb[0].mxu0 %v238
          %v367 = vpop.f32.mrb[0].mxu0
          %v368 = vadd.f32 0.0, %v367
          %v369 = vpop.f32.mrb[0].mxu0
          %370 = vmatprep.mubr.f32.mxu0 0.0
          %371 = vmatmul.mubr.f32.gmra.mrb[0].mxu0 %v241
          %v372 = vpop.f32.mrb[0].mxu0
          %v373 = vadd.f32 0.0, %v372
          %v374 = vpop.f32.mrb[0].mxu0
          %375 = vmatprep.mubr.f32.mxu0 0.0
          %376 = vmatmul.mubr.f32.gmra.mrb[0].mxu0 %v244
          %v377 = vpop.f32.mrb[0].mxu0
          %v378 = vadd.f32 0.0, %v377
          %v379 = vpop.f32.mrb[0].mxu0
          %380 = vmatprep.mubr.f32.mxu0 0.0
          %381 = vmatmul.mubr.f32.gmra.mrb[0].mxu0 %v247
          %v382 = vpop.f32.mrb[0].mxu0
          %v383 = vadd.f32 0.0, %v382
          %v384 = vpop.f32.mrb[0].mxu0
          %385 = vmatprep.mubr.f32.mxu0 0.0
          %386 = vmatmul.mubr.f32.gmra.mrb[0].mxu0 %v250
          %v387 = vpop.f32.mrb[0].mxu0
          %v388 = vadd.f32 0.0, %v387
          %v389 = vpop.f32.mrb[0].mxu0
          %390 = vmatprep.mubr.f32.mxu0 0.0
          %391 = vmatmul.mubr.f32.gmra.mrb[0].mxu0 %v253
          %v392 = vpop.f32.mrb[0].mxu0
          %v393 = vadd.f32 0.0, %v392
          %v394 = vpop.f32.mrb[0].mxu0
          %395 = vmatprep.mubr.f32.mxu0 0.0
          %396 = vmatmul.mubr.f32.gmra.mrb[0].mxu0 %v256
          %v397 = vpop.f32.mrb[0].mxu0
          %v398 = vadd.f32 0.0, %v397
          %v399 = vpop.f32.mrb[0].mxu0
          %400 = vmatprep.mubr.f32.mxu0 0.0
          %401 = vmatmul.mubr.f32.gmra.mrb[0].mxu0 %v259
          %v402 = vpop.f32.mrb[0].mxu0
          %v403 = vadd.f32 0.0, %v402
          %v404 = vpop.f32.mrb[0].mxu0
          %405 = vdwg.mxu0
          %406 = vst [vmem:[#allocation2] sm:$0xff] %v328
          %407 = vst [vmem:[#allocation2 + $0x8] sm:$0xff] %v333
          %408 = vst [vmem:[#allocation2 + $0x10] sm:$0xff] %v338
          %409 = vst [vmem:[#allocation2 + $0x18] sm:$0xff] %v343
          %410 = vst [vmem:[#allocation2 + $0x20] sm:$0xff] %v348
          %411 = vst [vmem:[#allocation2 + $0x28] sm:$0xff] %v353
          %412 = vst [vmem:[#allocation2 + $0x30] sm:$0xff] %v358
          %413 = vst [vmem:[#allocation2 + $0x38] sm:$0xff] %v363
          %414 = vst [vmem:[#allocation2 + $0x40] sm:$0xff] %v368
          %415 = vst [vmem:[#allocation2 + $0x48] sm:$0xff] %v373
          %416 = vst [vmem:[#allocation2 + $0x50] sm:$0xff] %v378
          %417 = vst [vmem:[#allocation2 + $0x58] sm:$0xff] %v383
          %418 = vst [vmem:[#allocation2 + $0x60] sm:$0xff] %v388
          %419 = vst [vmem:[#allocation2 + $0x68] sm:$0xff] %v393
          %420 = vst [vmem:[#allocation2 + $0x70] sm:$0xff] %v398
          %421 = vst [vmem:[#allocation2 + $0x78] sm:$0xff] %v403
          %v422 = vld [vmem:[%s2] sm:$0x3]
          %v423 = vlaneseq
          %v424 = vshrl.u32 %v423, 7
          %v425 = vsub.s32 0, %v424
          %v426 = vrot.slane %v422, %v425
          %v427 = vmul.f32 %v328, %v426
          %v428 = vmul.f32 %v333, %v426
          %v429 = vmul.f32 %v338, %v426
          %v430 = vmul.f32 %v343, %v426
          %v431 = vmul.f32 %v348, %v426
          %v432 = vmul.f32 %v353, %v426
          %v433 = vmul.f32 %v358, %v426
          %v434 = vmul.f32 %v363, %v426
          %v435 = vmul.f32 %v368, %v426
          %v436 = vmul.f32 %v373, %v426
          %v437 = vmul.f32 %v378, %v426
          %v438 = vmul.f32 %v383, %v426
          %v439 = vmul.f32 %v388, %v426
          %v440 = vmul.f32 %v393, %v426
          %v441 = vmul.f32 %v398, %v426
          %v442 = vmul.f32 %v403, %v426
          %443 = vadd.xlane.f32.xlu0 %v427
          %v444 = vpop.xlane.xlu0 %443
          %445 = vadd.xlane.f32.xlu0 %v428
          %v446 = vpop.xlane.xlu0 %445
          %447 = vadd.xlane.f32.xlu0 %v429
          %v448 = vpop.xlane.xlu0 %447
          %449 = vadd.xlane.f32.xlu0 %v430
          %v450 = vpop.xlane.xlu0 %449
          %451 = vadd.xlane.f32.xlu0 %v431
          %v452 = vpop.xlane.xlu0 %451
          %453 = vadd.xlane.f32.xlu0 %v432
          %v454 = vpop.xlane.xlu0 %453
          %455 = vadd.xlane.f32.xlu0 %v433
          %v456 = vpop.xlane.xlu0 %455
          %457 = vadd.xlane.f32.xlu0 %v434
          %v458 = vpop.xlane.xlu0 %457
          %459 = vadd.xlane.f32.xlu0 %v435
          %v460 = vpop.xlane.xlu0 %459
          %461 = vadd.xlane.f32.xlu0 %v436
          %v462 = vpop.xlane.xlu0 %461
          %463 = vadd.xlane.f32.xlu0 %v437
          %v464 = vpop.xlane.xlu0 %463
          %465 = vadd.xlane.f32.xlu0 %v438
          %v466 = vpop.xlane.xlu0 %465
          %467 = vadd.xlane.f32.xlu0 %v439
          %v468 = vpop.xlane.xlu0 %467
          %469 = vadd.xlane.f32.xlu0 %v440
          %v470 = vpop.xlane.xlu0 %469
          %471 = vadd.xlane.f32.xlu0 %v441
          %v472 = vpop.xlane.xlu0 %471
          %473 = vadd.xlane.f32.xlu0 %v442
          %v474 = vpop.xlane.xlu0 %473
          %vm475 = vcmask 7168
          %476 = vst.msk [vmem:[#allocation3] sm:$0xff] %vm475, %v444
          %477 = vst.msk [vmem:[#allocation3 + $0x8] sm:$0xff] %vm475, %v446
          %478 = vst.msk [vmem:[#allocation3 + $0x10] sm:$0xff] %vm475, %v448
          %479 = vst.msk [vmem:[#allocation3 + $0x18] sm:$0xff] %vm475, %v450
          %480 = vst.msk [vmem:[#allocation3 + $0x20] sm:$0xff] %vm475, %v452
          %481 = vst.msk [vmem:[#allocation3 + $0x28] sm:$0xff] %vm475, %v454
          %482 = vst.msk [vmem:[#allocation3 + $0x30] sm:$0xff] %vm475, %v456
          %483 = vst.msk [vmem:[#allocation3 + $0x38] sm:$0xff] %vm475, %v458
          %484 = vst.msk [vmem:[#allocation3 + $0x40] sm:$0xff] %vm475, %v460
          %485 = vst.msk [vmem:[#allocation3 + $0x48] sm:$0xff] %vm475, %v462
          %486 = vst.msk [vmem:[#allocation3 + $0x50] sm:$0xff] %vm475, %v464
          %487 = vst.msk [vmem:[#allocation3 + $0x58] sm:$0xff] %vm475, %v466
          %488 = vst.msk [vmem:[#allocation3 + $0x60] sm:$0xff] %vm475, %v468
          %489 = vst.msk [vmem:[#allocation3 + $0x68] sm:$0xff] %vm475, %v470
          %490 = vst.msk [vmem:[#allocation3 + $0x70] sm:$0xff] %vm475, %v472
          %491 = vst.msk [vmem:[#allocation3 + $0x78] sm:$0xff] %vm475, %v474
          %v493 = vrot.slane %v422, 1
          %495 = vmatprep.subr.mxu0 0.0
          %496 = vmatpush1.xpose.msra.mxu0 %v328
          %497 = vmatprep.subr.mxu0 0.0
          %498 = vmatpush1.xpose.msra.mxu0 %v333
          %499 = vmatprep.subr.mxu0 0.0
          %500 = vmatpush1.xpose.msra.mxu0 %v338
          %501 = vmatprep.subr.mxu0 0.0
          %502 = vmatpush1.xpose.msra.mxu0 %v343
          %503 = vmatprep.subr.mxu0 0.0
          %504 = vmatpush1.xpose.msra.mxu0 %v348
          %505 = vmatprep.subr.mxu0 0.0
          %506 = vmatpush1.xpose.msra.mxu0 %v353
          %507 = vmatprep.subr.mxu0 0.0
          %508 = vmatpush1.xpose.msra.mxu0 %v358
          %509 = vmatprep.subr.mxu0 0.0
          %510 = vmatpush1.xpose.msra.mxu0 %v363
          %511 = vmatprep.subr.mxu0 0.0
          %512 = vmatpush1.xpose.msra.mxu0 %v368
          %513 = vmatprep.subr.mxu0 0.0
          %514 = vmatpush1.xpose.msra.mxu0 %v373
          %515 = vmatprep.subr.mxu0 0.0
          %516 = vmatpush1.xpose.msra.mxu0 %v378
          %517 = vmatprep.subr.mxu0 0.0
          %518 = vmatpush1.xpose.msra.mxu0 %v383
          %519 = vmatprep.subr.mxu0 0.0
          %520 = vmatpush1.xpose.msra.mxu0 %v388
          %521 = vmatprep.subr.mxu0 0.0
          %522 = vmatpush1.xpose.msra.mxu0 %v393
          %523 = vmatprep.subr.mxu0 0.0
          %524 = vmatpush1.xpose.msra.mxu0 %v398
          %525 = vmatprep.subr.mxu0 0.0
          %526 = vmatpush1.xpose.msra.mxu0 %v403
          %527 = vmatprep.subr.mxu0 0.0
          %528 = vmatpush1.xpose.msra.mxu0 0.0
          %529 = vmatprep.subr.mxu0 0.0
          %530 = vmatpush1.xpose.msra.mxu0 0.0
          %531 = vmatprep.subr.mxu0 0.0
          %532 = vmatpush1.xpose.msra.mxu0 0.0
          %533 = vmatprep.subr.mxu0 0.0
          %534 = vmatpush1.xpose.msra.mxu0 0.0
          %535 = vmatprep.subr.mxu0 0.0
          %536 = vmatpush1.xpose.msra.mxu0 0.0
          %537 = vmatprep.subr.mxu0 0.0
          %538 = vmatpush1.xpose.msra.mxu0 0.0
          %539 = vmatprep.subr.mxu0 0.0
          %540 = vmatpush1.xpose.msra.mxu0 0.0
          %541 = vmatprep.subr.mxu0 0.0
          %542 = vmatpush1.xpose.msra.mxu0 0.0
          %543 = vmatprep.subr.mxu0 0.0
          %544 = vmatpush1.xpose.msra.mxu0 0.0
          %545 = vmatprep.subr.mxu0 0.0
          %546 = vmatpush1.xpose.msra.mxu0 0.0
          %547 = vmatprep.subr.mxu0 0.0
          %548 = vmatpush1.xpose.msra.mxu0 0.0
          %549 = vmatprep.subr.mxu0 0.0
          %550 = vmatpush1.xpose.msra.mxu0 0.0
          %551 = vmatprep.subr.mxu0 0.0
          %552 = vmatpush1.xpose.msra.mxu0 0.0
          %553 = vmatprep.subr.mxu0 0.0
          %554 = vmatpush1.xpose.msra.mxu0 0.0
          %555 = vmatprep.subr.mxu0 0.0
          %556 = vmatpush1.xpose.msra.mxu0 0.0
          %557 = vmatprep.subr.mxu0 0.0
          %558 = vmatpush1.xpose.msra.mxu0 0.0
          %559 = vmatprep.mubr.f32.mxu0 0.0
          %560 = vmatmul.mubr.f32.gmra.mrb[0].mxu0 %v493
          %v561 = vpop.f32.mrb[0].mxu0
          %v562 = vadd.f32 0.0, %v561
          %v563 = vpop.f32.mrb[0].mxu0
          %564 = vdwg.mxu0
          %565 = vst [vmem:[#allocation4] sm:$0x1] %v562
          %566 = vst [vmem:[#allocation5] sm:$0xff] 0.0
          %567 = vst [vmem:[#allocation5 + $0x8] sm:$0xff] 0.0
          %568 = vst [vmem:[#allocation5 + $0x10] sm:$0xff] 0.0
          %569 = vst [vmem:[#allocation5 + $0x18] sm:$0xff] 0.0
          %570 = vst [vmem:[#allocation5 + $0x20] sm:$0xff] 0.0
          %571 = vst [vmem:[#allocation5 + $0x28] sm:$0xff] 0.0
          %572 = vst [vmem:[#allocation5 + $0x30] sm:$0xff] 0.0
          %573 = vst [vmem:[#allocation5 + $0x38] sm:$0xff] 0.0
          %574 = vst [vmem:[#allocation5 + $0x40] sm:$0xff] 0.0
          %575 = vst [vmem:[#allocation5 + $0x48] sm:$0xff] 0.0
          %576 = vst [vmem:[#allocation5 + $0x50] sm:$0xff] 0.0
          %577 = vst [vmem:[#allocation5 + $0x58] sm:$0xff] 0.0
          %578 = vst [vmem:[#allocation5 + $0x60] sm:$0xff] 0.0
          %579 = vst [vmem:[#allocation5 + $0x68] sm:$0xff] 0.0
          %580 = vst [vmem:[#allocation5 + $0x70] sm:$0xff] 0.0
          %581 = vst [vmem:[#allocation5 + $0x78] sm:$0xff] 0.0
        $region40: #{tpu_custom_call.1} parent=35 // pred_fallthru
          _
        %s582 = smul.u32 %s16, 32
        %s583 = scalar_lea.vmem [#allocation2], %s582
        %v584 = vld [vmem:[%s583] sm:$0xff]
        %v585 = vld [vmem:[%s583 + $0x8] sm:$0xff]
        %v586 = vld [vmem:[%s583 + $0x10] sm:$0xff]
        %v587 = vld [vmem:[%s583 + $0x18] sm:$0xff]
        %s588 = scalar_lea.vmem [#allocation3], %s582
        %v589 = vld [vmem:[%s588] sm:$0xff]
        %v590 = vld [vmem:[%s588 + $0x8] sm:$0xff]
        %v591 = vld [vmem:[%s588 + $0x10] sm:$0xff]
        %v592 = vld [vmem:[%s588 + $0x18] sm:$0xff]
        %v593 = vld [vmem:[#allocation4] sm:$0x1]
        %v594 = vld [vmem:[%s180] sm:$0xff]
        %vm595 = vnez %v594
        %597 = vset.pattern.permute.xlu0 0
        %598 = vperm.xlu0 %597, %v589
        %v599 = vpop.permute.xlu0 %598
        %602 = vset.pattern.permute.xlu0 0
        %603 = vperm.xlu0 %602, %v590
        %v604 = vpop.permute.xlu0 %603
        %607 = vset.pattern.permute.xlu0 0
        %608 = vperm.xlu0 %607, %v591
        %v609 = vpop.permute.xlu0 %608
        %612 = vset.pattern.permute.xlu0 0
        %613 = vperm.xlu0 %612, %v592
        %v614 = vpop.permute.xlu0 %613
        %v617 = vlaneseq
        %v618 = vshrl.u32 %v617, 7
        %v619 = vsub.s32 0, %v618
        %v620 = vrot.slane %v593, %v619
        %v622 = vadd.f32 %v599, %v620
        %v623 = vadd.f32 %v604, %v620
        %v624 = vadd.f32 %v609, %v620
        %v625 = vadd.f32 %v614, %v620
        %v626 = vmul.f32 %v622, 0.2
        %v627 = vmul.f32 %v623, 0.2
        %v628 = vmul.f32 %v624, 0.2
        %v629 = vmul.f32 %v625, 0.2
        %v630 = vmax.f32 %v622, %v626
        %v631 = vmax.f32 %v623, %v627
        %v632 = vmax.f32 %v624, %v628
        %v633 = vmax.f32 %v625, %v629
        %v634 = vsel %vm595, 16843009, 0
        %v635 = vunpack.c.0.s8 %v634
        %v636 = vunpack.c.1.s8 %v634
        %v637 = vunpack.c.2.s8 %v634
        %v638 = vunpack.c.3.s8 %v634
        %v639 = vpack.c.b16 %v635, %v635
        %v640 = vpack.c.b8 %v639, %v639
        %v641 = vpack.c.b16 %v636, %v636
        %v642 = vpack.c.b8 %v641, %v641
        %v643 = vpack.c.b16 %v637, %v637
        %v644 = vpack.c.b8 %v643, %v643
        %v645 = vpack.c.b16 %v638, %v638
        %v646 = vpack.c.b8 %v645, %v645
        %vm647 = vnez %v640
        %vm648 = vnez %v642
        %vm649 = vnez %v644
        %vm650 = vnez %v646
        %v651 = vsel %vm647, 16843009, 0
        %v652 = vsel %vm648, 16843009, 0
        %v653 = vsel %vm649, 16843009, 0
        %v654 = vsel %vm650, 16843009, 0
        %v655 = vunpack.c.0.s8 %v651
        %v656 = vunpack.c.0.s8 %v652
        %v657 = vunpack.c.0.s8 %v653
        %v658 = vunpack.c.0.s8 %v654
        %vm659 = vcmp.ne.s32.totalorder %v655, 0
        %vm660 = vcmp.ne.s32.totalorder %v656, 0
        %vm661 = vcmp.ne.s32.totalorder %v657, 0
        %vm662 = vcmp.ne.s32.totalorder %v658, 0
        %v663 = vsel %vm659, %v630, -1e+30
        %v664 = vsel %vm660, %v631, -1e+30
        %v665 = vsel %vm661, %v632, -1e+30
        %v666 = vsel %vm662, %v633, -1e+30
        %667 = vmax.xlane.f32.xlu0 %v663
        %v668 = vpop.xlane.xlu0 %667
        %669 = vmax.xlane.f32.xlu0 %v664
        %v670 = vpop.xlane.xlu0 %669
        %671 = vmax.xlane.f32.xlu0 %v665
        %v672 = vpop.xlane.xlu0 %671
        %673 = vmax.xlane.f32.xlu0 %v666
        %v674 = vpop.xlane.xlu0 %673
        %v675 = vsub.f32 %v630, %v668
        %v676 = vsub.f32 %v631, %v670
        %v677 = vsub.f32 %v632, %v672
        %v678 = vsub.f32 %v633, %v674
        %v679 = vmul.f32 %v675, 1.442695
        %v680 = vpow.pop %v679
        %v681 = vmul.f32 %v676, 1.442695
        %v682 = vpow.pop %v681
        %v683 = vmul.f32 %v677, 1.442695
        %v684 = vpow.pop %v683
        %v685 = vmul.f32 %v678, 1.442695
        %v686 = vpow.pop %v685
        %v687 = vsel %vm659, %v680, 0.0
        %v688 = vsel %vm660, %v682, 0.0
        %v689 = vsel %vm661, %v684, 0.0
        %v690 = vsel %vm662, %v686, 0.0
        %691 = vadd.xlane.f32.xlu0 %v687
        %v692 = vpop.xlane.xlu0 %691
        %693 = vadd.xlane.f32.xlu0 %v688
        %v694 = vpop.xlane.xlu0 %693
        %695 = vadd.xlane.f32.xlu0 %v689
        %v696 = vpop.xlane.xlu0 %695
        %697 = vadd.xlane.f32.xlu0 %v690
        %v698 = vpop.xlane.xlu0 %697
        %v699 = vmax.f32 %v692, 1e-30
        %v700 = vmax.f32 %v694, 1e-30
        %v701 = vmax.f32 %v696, 1e-30
        %v702 = vmax.f32 %v698, 1e-30
        %v703 = vrcp.pop %v699
        %v704 = vrcp.pop %v700
        %v705 = vrcp.pop %v701
        %v706 = vrcp.pop %v702
        %v707 = vmul.f32 %v687, %v703
        %v708 = vmul.f32 %v688, %v704
        %v709 = vmul.f32 %v689, %v705
        %v710 = vmul.f32 %v690, %v706
        %v711 = vld [vmem:[#allocation5] sm:$0xff]
        %v712 = vld [vmem:[#allocation5 + $0x8] sm:$0xff]
        %v713 = vld [vmem:[#allocation5 + $0x10] sm:$0xff]
        %v714 = vld [vmem:[#allocation5 + $0x18] sm:$0xff]
        %v715 = vld [vmem:[#allocation5 + $0x20] sm:$0xff]
        %v716 = vld [vmem:[#allocation5 + $0x28] sm:$0xff]
        %v717 = vld [vmem:[#allocation5 + $0x30] sm:$0xff]
        %v718 = vld [vmem:[#allocation5 + $0x38] sm:$0xff]
        %v719 = vld [vmem:[#allocation5 + $0x40] sm:$0xff]
        %v720 = vld [vmem:[#allocation5 + $0x48] sm:$0xff]
        %v721 = vld [vmem:[#allocation5 + $0x50] sm:$0xff]
        %v722 = vld [vmem:[#allocation5 + $0x58] sm:$0xff]
        %v723 = vld [vmem:[#allocation5 + $0x60] sm:$0xff]
        %v724 = vld [vmem:[#allocation5 + $0x68] sm:$0xff]
        %v725 = vld [vmem:[#allocation5 + $0x70] sm:$0xff]
        %v726 = vld [vmem:[#allocation5 + $0x78] sm:$0xff]
        %v727 = vpack.c.bf16 %v708, %v707
        %v728 = vpack.c.bf16 %v710, %v709
        %v729 = vpack.c.bf16 %v585, %v584
        %v730 = vpack.c.bf16 %v587, %v586
        %731 = vxpose.xlu0.c.b16.start [1/8] %v727, 128
        %732 = vxpose.xlu0.c.b16.cont [2/8] %v728, 128
        %733 = vxpose.xlu0.c.b16.cont [3/8] 0, 128
        %734 = vxpose.xlu0.c.b16.cont [4/8] 0, 128
        %735 = vxpose.xlu0.c.b16.cont [5/8] 0, 128
        %736 = vxpose.xlu0.c.b16.cont [6/8] 0, 128
        %737 = vxpose.xlu0.c.b16.cont [7/8] 0, 128
        %738 = vxpose.xlu0.c.b16.end [8/8] 0, 128
        %v739 = vpop.trf.xlu0
        %v740 = vpop.trf.xlu0
        %v741 = vpop.trf.xlu0
        %v742 = vpop.trf.xlu0
        %v743 = vpop.trf.xlu0
        %v744 = vpop.trf.xlu0
        %v745 = vpop.trf.xlu0
        %v746 = vpop.trf.xlu0
        %vm747 = vcmask 261120
        %v749 = vsel %vm747, %v739, 0
        %v752 = vsel %vm747, %v740, 0
        %v755 = vsel %vm747, %v741, 0
        %v758 = vsel %vm747, %v742, 0
        %v761 = vsel %vm747, %v743, 0
        %v764 = vsel %vm747, %v744, 0
        %v767 = vsel %vm747, %v745, 0
        %v770 = vsel %vm747, %v746, 0
        %772 = vmatprep.subr.bf16.mxu0 0
        %773 = vmatpush1.bf16.msra.mxu0 %v729
        %774 = vmatprep.subr.bf16.mxu0 0
        %775 = vmatpush1.bf16.msra.mxu0 %v730
        %776 = vmatprep.subr.bf16.mxu0 0
        %777 = vmatpush1.bf16.msra.mxu0 0
        %778 = vmatprep.subr.bf16.mxu0 0
        %779 = vmatpush1.bf16.msra.mxu0 0
        %780 = vmatprep.subr.bf16.mxu0 0
        %781 = vmatpush1.bf16.msra.mxu0 0
        %782 = vmatprep.subr.bf16.mxu0 0
        %783 = vmatpush1.bf16.msra.mxu0 0
        %784 = vmatprep.subr.bf16.mxu0 0
        %785 = vmatpush1.bf16.msra.mxu0 0
        %786 = vmatprep.subr.bf16.mxu0 0
        %787 = vmatpush1.bf16.msra.mxu0 0
        %788 = vmatprep.subr.bf16.mxu0 0
        %789 = vmatpush1.bf16.msra.mxu0 0
        %790 = vmatprep.subr.bf16.mxu0 0
        %791 = vmatpush1.bf16.msra.mxu0 0
        %792 = vmatprep.subr.bf16.mxu0 0
        %793 = vmatpush1.bf16.msra.mxu0 0
        %794 = vmatprep.subr.bf16.mxu0 0
        %795 = vmatpush1.bf16.msra.mxu0 0
        %796 = vmatprep.subr.bf16.mxu0 0
        %797 = vmatpush1.bf16.msra.mxu0 0
        %798 = vmatprep.subr.bf16.mxu0 0
        %799 = vmatpush1.bf16.msra.mxu0 0
        %800 = vmatprep.subr.bf16.mxu0 0
        %801 = vmatpush1.bf16.msra.mxu0 0
        %802 = vmatprep.subr.bf16.mxu0 0
        %803 = vmatpush1.bf16.msra.mxu0 0
        %804 = vmatprep.mubr.bf16.mxu0 0
        %805 = vmatmul.mubr.bf16.gmra.mrb[0].mxu0 %v749
        %v806 = vpop.f32.mrb[0].mxu0
        %v807 = vadd.f32 0.0, %v806
        %v808 = vpop.f32.mrb[0].mxu0
        %v809 = vpop.f32.mrb[0].mxu0
        %v810 = vadd.f32 0.0, %v809
        %v811 = vpop.f32.mrb[0].mxu0
        %812 = vmatprep.mubr.bf16.mxu0 0
        %813 = vmatmul.mubr.bf16.gmra.mrb[0].mxu0 %v752
        %v814 = vpop.f32.mrb[0].mxu0
        %v815 = vadd.f32 0.0, %v814
        %v816 = vpop.f32.mrb[0].mxu0
        %v817 = vpop.f32.mrb[0].mxu0
        %v818 = vadd.f32 0.0, %v817
        %v819 = vpop.f32.mrb[0].mxu0
        %820 = vmatprep.mubr.bf16.mxu0 0
        %821 = vmatmul.mubr.bf16.gmra.mrb[0].mxu0 %v755
        %v822 = vpop.f32.mrb[0].mxu0
        %v823 = vadd.f32 0.0, %v822
        %v824 = vpop.f32.mrb[0].mxu0
        %v825 = vpop.f32.mrb[0].mxu0
        %v826 = vadd.f32 0.0, %v825
        %v827 = vpop.f32.mrb[0].mxu0
        %828 = vmatprep.mubr.bf16.mxu0 0
        %829 = vmatmul.mubr.bf16.gmra.mrb[0].mxu0 %v758
        %v830 = vpop.f32.mrb[0].mxu0
        %v831 = vadd.f32 0.0, %v830
        %v832 = vpop.f32.mrb[0].mxu0
        %v833 = vpop.f32.mrb[0].mxu0
        %v834 = vadd.f32 0.0, %v833
        %v835 = vpop.f32.mrb[0].mxu0
        %836 = vmatprep.mubr.bf16.mxu0 0
        %837 = vmatmul.mubr.bf16.gmra.mrb[0].mxu0 %v761
        %v838 = vpop.f32.mrb[0].mxu0
        %v839 = vadd.f32 0.0, %v838
        %v840 = vpop.f32.mrb[0].mxu0
        %v841 = vpop.f32.mrb[0].mxu0
        %v842 = vadd.f32 0.0, %v841
        %v843 = vpop.f32.mrb[0].mxu0
        %844 = vmatprep.mubr.bf16.mxu0 0
        %845 = vmatmul.mubr.bf16.gmra.mrb[0].mxu0 %v764
        %v846 = vpop.f32.mrb[0].mxu0
        %v847 = vadd.f32 0.0, %v846
        %v848 = vpop.f32.mrb[0].mxu0
        %v849 = vpop.f32.mrb[0].mxu0
        %v850 = vadd.f32 0.0, %v849
        %v851 = vpop.f32.mrb[0].mxu0
        %852 = vmatprep.mubr.bf16.mxu0 0
        %853 = vmatmul.mubr.bf16.gmra.mrb[0].mxu0 %v767
        %v854 = vpop.f32.mrb[0].mxu0
        %v855 = vadd.f32 0.0, %v854
        %v856 = vpop.f32.mrb[0].mxu0
        %v857 = vpop.f32.mrb[0].mxu0
        %v858 = vadd.f32 0.0, %v857
        %v859 = vpop.f32.mrb[0].mxu0
        %860 = vmatprep.mubr.bf16.mxu0 0
        %861 = vmatmul.mubr.bf16.gmra.mrb[0].mxu0 %v770
        %v862 = vpop.f32.mrb[0].mxu0
        %v863 = vadd.f32 0.0, %v862
        %v864 = vpop.f32.mrb[0].mxu0
        %v865 = vpop.f32.mrb[0].mxu0
        %v866 = vadd.f32 0.0, %v865
        %v867 = vpop.f32.mrb[0].mxu0
        %868 = vdwg.mxu0
        %v869 = vadd.f32 %v711, %v807
        %v870 = vadd.f32 %v712, %v810
        %v871 = vadd.f32 %v713, %v815
        %v872 = vadd.f32 %v714, %v818
        %v873 = vadd.f32 %v715, %v823
        %v874 = vadd.f32 %v716, %v826
        %v875 = vadd.f32 %v717, %v831
        %v876 = vadd.f32 %v718, %v834
        %v877 = vadd.f32 %v719, %v839
        %v878 = vadd.f32 %v720, %v842
        %v879 = vadd.f32 %v721, %v847
        %v880 = vadd.f32 %v722, %v850
        %v881 = vadd.f32 %v723, %v855
        %v882 = vadd.f32 %v724, %v858
        %v883 = vadd.f32 %v725, %v863
        %v884 = vadd.f32 %v726, %v866
        %885 = vst [vmem:[#allocation5] sm:$0xff] %v869
        %886 = vst [vmem:[#allocation5 + $0x8] sm:$0xff] %v870
        %887 = vst [vmem:[#allocation5 + $0x10] sm:$0xff] %v871
        %888 = vst [vmem:[#allocation5 + $0x18] sm:$0xff] %v872
        %889 = vst [vmem:[#allocation5 + $0x20] sm:$0xff] %v873
        %890 = vst [vmem:[#allocation5 + $0x28] sm:$0xff] %v874
        %891 = vst [vmem:[#allocation5 + $0x30] sm:$0xff] %v875
        %892 = vst [vmem:[#allocation5 + $0x38] sm:$0xff] %v876
        %893 = vst [vmem:[#allocation5 + $0x40] sm:$0xff] %v877
        %894 = vst [vmem:[#allocation5 + $0x48] sm:$0xff] %v878
        %895 = vst [vmem:[#allocation5 + $0x50] sm:$0xff] %v879
        %896 = vst [vmem:[#allocation5 + $0x58] sm:$0xff] %v880
        %897 = vst [vmem:[#allocation5 + $0x60] sm:$0xff] %v881
        %898 = vst [vmem:[#allocation5 + $0x68] sm:$0xff] %v882
        %899 = vst [vmem:[#allocation5 + $0x70] sm:$0xff] %v883
        %900 = vst [vmem:[#allocation5 + $0x78] sm:$0xff] %v884
        %p901 = scmp.eq.s32.totalorder %s16, 3
        // Predicated region
        $region41: #{tpu_custom_call.1} parent=35 // pred_check
          %p902 = pneg %p901
        $region42: #{tpu_custom_call.1} parent=35 // pred_check_branch
          %904 = sbr.rel (%p902) target = $region44
        $region43: #{tpu_custom_call.1} parent=35 // pred_region
          %v905 = vld [vmem:[#allocation5] sm:$0xff]
          %v906 = vld [vmem:[#allocation5 + $0x8] sm:$0xff]
          %v907 = vld [vmem:[#allocation5 + $0x10] sm:$0xff]
          %v908 = vld [vmem:[#allocation5 + $0x18] sm:$0xff]
          %v909 = vld [vmem:[#allocation5 + $0x20] sm:$0xff]
          %v910 = vld [vmem:[#allocation5 + $0x28] sm:$0xff]
          %v911 = vld [vmem:[#allocation5 + $0x30] sm:$0xff]
          %v912 = vld [vmem:[#allocation5 + $0x38] sm:$0xff]
          %v913 = vld [vmem:[#allocation5 + $0x40] sm:$0xff]
          %v914 = vld [vmem:[#allocation5 + $0x48] sm:$0xff]
          %v915 = vld [vmem:[#allocation5 + $0x50] sm:$0xff]
          %v916 = vld [vmem:[#allocation5 + $0x58] sm:$0xff]
          %v917 = vld [vmem:[#allocation5 + $0x60] sm:$0xff]
          %v918 = vld [vmem:[#allocation5 + $0x68] sm:$0xff]
          %v919 = vld [vmem:[#allocation5 + $0x70] sm:$0xff]
          %v920 = vld [vmem:[#allocation5 + $0x78] sm:$0xff]
          %vm921 = vcmp.gt.f32.partialorder %v905, 0.0
          %vm922 = vcmp.gt.f32.partialorder %v906, 0.0
          %vm923 = vcmp.gt.f32.partialorder %v907, 0.0
          %vm924 = vcmp.gt.f32.partialorder %v908, 0.0
          %vm925 = vcmp.gt.f32.partialorder %v909, 0.0
          %vm926 = vcmp.gt.f32.partialorder %v910, 0.0
          %vm927 = vcmp.gt.f32.partialorder %v911, 0.0
          %vm928 = vcmp.gt.f32.partialorder %v912, 0.0
          %vm929 = vcmp.gt.f32.partialorder %v913, 0.0
          %vm930 = vcmp.gt.f32.partialorder %v914, 0.0
          %vm931 = vcmp.gt.f32.partialorder %v915, 0.0
          %vm932 = vcmp.gt.f32.partialorder %v916, 0.0
          %vm933 = vcmp.gt.f32.partialorder %v917, 0.0
          %vm934 = vcmp.gt.f32.partialorder %v918, 0.0
          %vm935 = vcmp.gt.f32.partialorder %v919, 0.0
          %vm936 = vcmp.gt.f32.partialorder %v920, 0.0
          %v937 = vmin.f32 %v905, 0.0
          %v938 = vmin.f32 %v906, 0.0
          %v939 = vmin.f32 %v907, 0.0
          %v940 = vmin.f32 %v908, 0.0
          %v941 = vmin.f32 %v909, 0.0
          %v942 = vmin.f32 %v910, 0.0
          %v943 = vmin.f32 %v911, 0.0
          %v944 = vmin.f32 %v912, 0.0
          %v945 = vmin.f32 %v913, 0.0
          %v946 = vmin.f32 %v914, 0.0
          %v947 = vmin.f32 %v915, 0.0
          %v948 = vmin.f32 %v916, 0.0
          %v949 = vmin.f32 %v917, 0.0
          %v950 = vmin.f32 %v918, 0.0
          %v951 = vmin.f32 %v919, 0.0
          %v952 = vmin.f32 %v920, 0.0
          %v953 = vmul.f32 %v937, 1.442695
          %v954 = vpow.pop %v953
          %v955 = vmul.f32 %v938, 1.442695
          %v956 = vpow.pop %v955
          %v957 = vmul.f32 %v939, 1.442695
          %v958 = vpow.pop %v957
          %v959 = vmul.f32 %v940, 1.442695
          %v960 = vpow.pop %v959
          %v961 = vmul.f32 %v941, 1.442695
          %v962 = vpow.pop %v961
          %v963 = vmul.f32 %v942, 1.442695
          %v964 = vpow.pop %v963
          %v965 = vmul.f32 %v943, 1.442695
          %v966 = vpow.pop %v965
          %v967 = vmul.f32 %v944, 1.442695
          %v968 = vpow.pop %v967
          %v969 = vmul.f32 %v945, 1.442695
          %v970 = vpow.pop %v969
          %v971 = vmul.f32 %v946, 1.442695
          %v972 = vpow.pop %v971
          %v973 = vmul.f32 %v947, 1.442695
          %v974 = vpow.pop %v973
          %v975 = vmul.f32 %v948, 1.442695
          %v976 = vpow.pop %v975
          %v977 = vmul.f32 %v949, 1.442695
          %v978 = vpow.pop %v977
          %v979 = vmul.f32 %v950, 1.442695
          %v980 = vpow.pop %v979
          %v981 = vmul.f32 %v951, 1.442695
          %v982 = vpow.pop %v981
          %v983 = vmul.f32 %v952, 1.442695
          %v984 = vpow.pop %v983
          %v985 = vsub.f32 %v954, 1.0
          %v986 = vsub.f32 %v956, 1.0
          %v987 = vsub.f32 %v958, 1.0
          %v988 = vsub.f32 %v960, 1.0
          %v989 = vsub.f32 %v962, 1.0
          %v990 = vsub.f32 %v964, 1.0
          %v991 = vsub.f32 %v966, 1.0
          %v992 = vsub.f32 %v968, 1.0
          %v993 = vsub.f32 %v970, 1.0
          %v994 = vsub.f32 %v972, 1.0
          %v995 = vsub.f32 %v974, 1.0
          %v996 = vsub.f32 %v976, 1.0
          %v997 = vsub.f32 %v978, 1.0
          %v998 = vsub.f32 %v980, 1.0
          %v999 = vsub.f32 %v982, 1.0
          %v1000 = vsub.f32 %v984, 1.0
          %v1001 = vsel %vm921, %v905, %v985
          %v1002 = vsel %vm922, %v906, %v986
          %v1003 = vsel %vm923, %v907, %v987
          %v1004 = vsel %vm924, %v908, %v988
          %v1005 = vsel %vm925, %v909, %v989
          %v1006 = vsel %vm926, %v910, %v990
          %v1007 = vsel %vm927, %v911, %v991
          %v1008 = vsel %vm928, %v912, %v992
          %v1009 = vsel %vm929, %v913, %v993
          %v1010 = vsel %vm930, %v914, %v994
          %v1011 = vsel %vm931, %v915, %v995
          %v1012 = vsel %vm932, %v916, %v996
          %v1013 = vsel %vm933, %v917, %v997
          %v1014 = vsel %vm934, %v918, %v998
          %v1015 = vsel %vm935, %v919, %v999
          %v1016 = vsel %vm936, %v920, %v1000
          %1017 = vst [vmem:[#allocation6] sm:$0xff] %v1001
          %1018 = vst [vmem:[#allocation6 + $0x8] sm:$0xff] %v1002
          %1019 = vst [vmem:[#allocation6 + $0x10] sm:$0xff] %v1003
          %1020 = vst [vmem:[#allocation6 + $0x18] sm:$0xff] %v1004
          %1021 = vst [vmem:[#allocation6 + $0x20] sm:$0xff] %v1005
          %1022 = vst [vmem:[#allocation6 + $0x28] sm:$0xff] %v1006
          %1023 = vst [vmem:[#allocation6 + $0x30] sm:$0xff] %v1007
          %1024 = vst [vmem:[#allocation6 + $0x38] sm:$0xff] %v1008
          %1025 = vst [vmem:[#allocation6 + $0x40] sm:$0xff] %v1009
          %1026 = vst [vmem:[#allocation6 + $0x48] sm:$0xff] %v1010
          %1027 = vst [vmem:[#allocation6 + $0x50] sm:$0xff] %v1011
          %1028 = vst [vmem:[#allocation6 + $0x58] sm:$0xff] %v1012
          %1029 = vst [vmem:[#allocation6 + $0x60] sm:$0xff] %v1013
          %1030 = vst [vmem:[#allocation6 + $0x68] sm:$0xff] %v1014
          %1031 = vst [vmem:[#allocation6 + $0x70] sm:$0xff] %v1015
          %1032 = vst [vmem:[#allocation6 + $0x78] sm:$0xff] %v1016
        $region44: #{tpu_custom_call.1} parent=35 // pred_fallthru
          _
        // Predicated region
        $region45: #{tpu_custom_call.1} parent=35 // pred_check
          %p1033 = pneg %p118
        $region46: #{tpu_custom_call.1} parent=35 // pred_check_branch
          %1035 = sbr.rel (%p1033) target = $region48
        $region47: #{tpu_custom_call.1} parent=35 // pred_region
          %s1037 = ssub.s32 2048, 2048
          %1038 = vsyncadd [#allocation7], %s1037
          %s1039 = sshll.u32 [#allocation6], 4
          %s1040 = int_to_ptr.vmem [resolvable:$true] %s1039
          %1045 = dma.vmem_to_hbm [thread:$0]  %s1040, 2048, %s4, [#allocation7], 128, 128, 8
        $region48: #{tpu_custom_call.1} parent=35 // pred_fallthru
          _
        // Predicated region
        $region49: #{tpu_custom_call.1} parent=35 // pred_check
          %p1046 = pneg %p118
        $region50: #{tpu_custom_call.1} parent=35 // pred_check_branch
          %1048 = sbr.rel (%p1046) target = $region52
        $region51: #{tpu_custom_call.1} parent=35 // pred_region
          %1049 = dma.done [#allocation7], 2048
        $region52: #{tpu_custom_call.1} parent=35 // pred_fallthru
          _
      $region36: #{tpu_custom_call.1} parent=5 // pred_fallthru
        _
      %p1050 = scmp.le.s32.totalorder 2, %s11
      // Predicated region
      $region53: #{tpu_custom_call.1} parent=5 // pred_check
        %p1051 = pneg %p1050
      $region54: #{tpu_custom_call.1} parent=5 // pred_check_branch
        %1053 = sbr.rel (%p1051) target = $region56
      $region55: #{tpu_custom_call.1} parent=5 // pred_region
        %s1054 = ssub.s32 %s11, 2
      $region56: #{tpu_custom_call.1} parent=5 // pred_fallthru
        _
    $region6: #{tpu_custom_call.1} parent=1 // loop_footer
      %s15 = sadd.s32 1, %s11
    $region7: #{tpu_custom_call.1} parent=1 // loop_footer_branch
      %10 = sbr.rel target = $region3
    $region8: #{tpu_custom_call.1} parent=1 // loop_exit
      _
    %1055 = vsyncpa [#allocation7], 1
    %s1056 = scalar_lea.sflag [#allocation7], 1
    %1057 = vsyncpa %s1056, 1

</llo_original>
